<compile_context>
chip_gen: v7x
topology: tpu7x:2x2x1
jax: 0.10.0
libtpu: 0.0.40
codegen_flags: <defaults>
</compile_context>

<pallas_src>
import math

import jax
import jax.numpy as jnp
from jax.experimental import pallas as pl
from jax.experimental.pallas import tpu as pltpu

_AMP = math.sqrt(1.01)      # cos(z) + 0.1*sin(z) == _AMP * cos(z - _PHASE)
_PHASE = math.atan(0.1)


def _round_up(x: int, m: int) -> int:
    return ((x + m - 1) // m) * m


def _tpu_generation() -> str:
    """Best-effort TPU generation detection for tile-size defaults."""
    try:
        kind = jax.devices()[0].device_kind.lower()
    except Exception:  # pragma: no cover - no accelerator visible
        return "unknown"
    if "v5 lite" in kind or "v5e" in kind or "v5litepod" in kind:
        return "v5e"
    if "v6" in kind:
        return "v6e"
    if "7" in kind:          # "TPU7x" / "TPU v7"
        return "v7x"
    return "unknown"


# (tm, tn, tk, mxu_m_multiple, vmem_limit_bytes) per generation.
_TILE_CONFIG = {
    "v5e":     (512, 1024, 512, 128, 64 * 1024 * 1024),
    "v6e":     (1024, 2048, 512, 256, 64 * 1024 * 1024),
    "v7x":     (512, 1024, 512, 256, 48 * 1024 * 1024),
    "unknown": (512, 1024, 512, 128, 48 * 1024 * 1024),
}


def _pick_tm(batch: int, default_tm: int, mxu_m: int) -> int:
    """MXU-shaped, padding-aware M tile: largest multiple of mxu_m <= default
    with minimal padded-M waste; single (sublane-aligned) tile for small B."""
    if batch <= default_tm:
        return _round_up(batch, 16)   # one M tile; 16 covers bf16 sublane packing
    best_tm, best_waste = mxu_m, None
    for cand in range(mxu_m, default_tm + 1, mxu_m):
        waste = _round_up(batch, cand) - batch
        if best_waste is None or waste <= best_waste:
            best_tm, best_waste = cand, waste
    return best_tm


def _quantum_linear_kernel(x_ref, w_ref, b_ref, o_ref, acc_ref):
    """One (tm, tn) output tile, accumulating over the K grid axis."""
    k = pl.program_id(2)

    @pl.when(k == 0)
    def _init():
        # Bias (already phase-folded) seeds the accumulator -> no epilogue add.
        acc_ref[...] = jnp.broadcast_to(b_ref[...], acc_ref.shape)

    # MXU: bf16 tiles in, f32 accumulation out.
    acc_ref[...] += jnp.dot(x_ref[...], w_ref[...],
                            preferred_element_type=jnp.float32)

    @pl.when(k == pl.num_programs(2) - 1)
    def _epilogue():
        z = acc_ref[...]
        if o_ref.dtype == jnp.bfloat16:
            # bf16 VALU epilogue on v6e/v7x; output is bf16 anyway.
            z = z.astype(jnp.bfloat16)
        o_ref[...] = (_AMP * jnp.cos(z)).astype(o_ref.dtype)


def prepare_quantum_weights(theta, bias, *, tn, tk, compute_dtype=jnp.bfloat16):
    """One-time weight prep: transpose + cast + phase-fold + pad.

    For static (inference) weights, call this once at weight-update time and
    reuse the result instead of rebuilding it every forward.
    """
    Out, In = theta.shape
    Np = _round_up(Out, tn)
    Kp = _round_up(In, tk)
    w_p = jnp.pad(theta.T.astype(compute_dtype), ((0, Kp - In), (0, Np - Out)))
    b_p = jnp.pad((bias.astype(jnp.float32) - _PHASE).reshape(1, Out),
                  ((0, 0), (0, Np - Out)))
    return w_p, b_p


def quantum_inspired_layer(x, theta, bias, *, compute_dtype=jnp.bfloat16,
                           tm=None, tn=None, tk=None):
    """x: (..., In), theta: (Out, In), bias: (Out,) -> (..., Out) in x.dtype."""
    orig_shape = x.shape
    In = orig_shape[-1]
    Out = theta.shape[0]
    x2 = x.reshape(-1, In)
    B = x2.shape[0]

    gen = _tpu_generation()
    d_tm, d_tn, d_tk, mxu_m, vmem_limit = _TILE_CONFIG[gen]
    tm = tm if tm is not None else d_tm
    tn = tn if tn is not None else d_tn
    tk = tk if tk is not None else d_tk

    # Tile shaping: tm MXU-shaped & padding-aware; tn/tk lane-dense 128-multiples
    # clamped to the padded problem.
    tm = _pick_tm(B, tm, mxu_m)
    tn = min(tn, _round_up(Out, 128))
    tk = min(tk, _round_up(In, 128))

    Mp = _round_up(B, tm)
    Np = _round_up(Out, tn)
    Kp = _round_up(In, tk)

    out_dtype = x.dtype

    # Wrapper-side prep. x must be padded/cast per call; the weight prep below
    # is cacheable for static weights (see prepare_quantum_weights docstring).
    x_p = jnp.pad(x2.astype(compute_dtype), ((0, Mp - B), (0, Kp - In)))
    w_p, b_p = prepare_quantum_weights(theta, bias, tn=tn, tk=tk,
                                       compute_dtype=compute_dtype)

    grid = (Mp // tm, Np // tn, Kp // tk)

    itemsize_in = jnp.dtype(compute_dtype).itemsize
    itemsize_out = jnp.dtype(out_dtype).itemsize
    cost = pl.CostEstimate(
        flops=2 * Mp * Np * Kp,
        transcendentals=Mp * Np,
        bytes_accessed=(Mp * Kp * itemsize_in + Kp * Np * itemsize_in
                        + Np * 4 + Mp * Np * itemsize_out),
    )

    out_p = pl.pallas_call(
        _quantum_linear_kernel,
        out_shape=jax.ShapeDtypeStruct((Mp, Np), out_dtype),
        grid=grid,
        in_specs=[
            pl.BlockSpec((tm, tk), lambda i, j, k: (i, k)),   # x tile
            pl.BlockSpec((tk, tn), lambda i, j, k: (k, j)),   # theta.T tile
            pl.BlockSpec((1, tn), lambda i, j, k: (0, j)),    # bias tile (N only)
        ],
        out_specs=pl.BlockSpec((tm, tn), lambda i, j, k: (i, j)),
        scratch_shapes=[pltpu.VMEM((tm, tn), jnp.float32)],   # f32 accumulator
        compiler_params=pltpu.CompilerParams(
            dimension_semantics=("parallel", "parallel", "arbitrary"),
            vmem_limit_bytes=vmem_limit,
        ),
        cost_estimate=cost,
    )(x_p, w_p, b_p)

    out = out_p[:B, :Out]
    return out.reshape(*orig_shape[:-1], Out)


if __name__ == "__main__":
    key = jax.random.PRNGKey(0)
    k_x, k_theta = jax.random.split(key)

    batch = 8
    in_features = 32
    out_features = 32

    # Deterministic parameter init (mirrors torch.randn(out,in)*0.1 and zeros(out)).
    theta = 0.1 * jax.random.normal(k_theta, (out_features, in_features), jnp.float32)
    bias = jnp.zeros((out_features,), jnp.float32)
    x = jax.random.normal(k_x, (batch, in_features), jnp.float32)

    out = quantum_inspired_layer(x, theta, bias)
    out = jax.block_until_ready(out)

    # Reference: same math as the PyTorch forward, plain JAX in f32.
    z_ref = x @ theta.T + bias
    ref = jnp.cos(z_ref) + 0.1 * jnp.sin(z_ref)
    # bf16 MXU inputs -> looser tolerance than a pure-f32 matmul.
    err = float(jnp.max(jnp.abs(out - ref)))
    assert jnp.allclose(out, ref, atol=2e-2, rtol=2e-2), f"max abs err {err}"

    print("KERNEL_OK")
</pallas_src>

<mosaic_0001>
module attributes {stable_mosaic.version = 11 : i64} {
  func.func @_quantum_linear_kernel(%arg0: i32, %arg1: i32, %arg2: i32, %arg3: memref<16x128xbf16, #tpu.memory_space<vmem>>, %arg4: memref<128x128xbf16, #tpu.memory_space<vmem>>, %arg5: memref<1x128xf32, #tpu.memory_space<vmem>>, %arg6: memref<16x128xf32, #tpu.memory_space<vmem>>, %arg7: memref<16x128xf32, #tpu.memory_space<vmem>>) attributes {dimension_semantics = [#tpu.dimension_semantics<parallel>, #tpu.dimension_semantics<parallel>, #tpu.dimension_semantics<arbitrary>], iteration_bounds = array<i64: 1, 1, 1>, scalar_prefetch = 0 : i64, scratch_operands = 1 : i64, tpu.core_type = #tpu.core_type<tc>, window_params = [{transform_indices = @transform_0, window_bounds = array<i64: 16, 128>}, {transform_indices = @transform_1, window_bounds = array<i64: 128, 128>}, {transform_indices = @transform_2, window_bounds = array<i64: 1, 128>}, {transform_indices = @transform_3, window_bounds = array<i64: 16, 128>}]} {
    %c0_i32 = arith.constant 0 : i32
    %0 = arith.cmpi eq, %arg2, %c0_i32 : i32
    %1 = arith.extui %0 : i1 to i32
    %c0_i32_0 = arith.constant 0 : i32
    %2 = arith.cmpi ne, %1, %c0_i32_0 : i32
    scf.if %2 {
      %c0_10 = arith.constant 0 : index
      %c0_11 = arith.constant 0 : index
      %12 = vector.load %arg5[%c0_10, %c0_11] : memref<1x128xf32, #tpu.memory_space<vmem>>, vector<1x128xf32>
      %13 = vector.shape_cast %12 : vector<1x128xf32> to vector<1x128xf32>
      %14 = vector.broadcast %13 : vector<1x128xf32> to vector<16x128xf32>
      %c0_12 = arith.constant 0 : index
      %c0_13 = arith.constant 0 : index
      %15 = vector.load %arg7[%c0_12, %c0_13] : memref<16x128xf32, #tpu.memory_space<vmem>>, vector<16x128xf32>
      tpu.vector_store %arg7[%c0_12, %c0_13], %14 {strides = array<i32>} : memref<16x128xf32, #tpu.memory_space<vmem>>, vector<16x128xf32>,
    } else {
    }
    %c0 = arith.constant 0 : index
    %c0_1 = arith.constant 0 : index
    %3 = vector.load %arg7[%c0, %c0_1] : memref<16x128xf32, #tpu.memory_space<vmem>>, vector<16x128xf32>
    %c0_2 = arith.constant 0 : index
    %c0_3 = arith.constant 0 : index
    %4 = vector.load %arg3[%c0_2, %c0_3] : memref<16x128xbf16, #tpu.memory_space<vmem>>, vector<16x128xbf16>
    %c0_4 = arith.constant 0 : index
    %c0_5 = arith.constant 0 : index
    %5 = vector.load %arg4[%c0_4, %c0_5] : memref<128x128xbf16, #tpu.memory_space<vmem>>, vector<128x128xbf16>
    %cst = arith.constant dense<0.000000e+00> : vector<16x128xf32>
    %6 = tpu.matmul %4, %5, %cst {dimension_numbers = #tpu.dot_dimension_numbers<[1], [0], [0], [1], [0, 0, 1, 1], [], []>} : vector<16x128xbf16>, vector<128x128xbf16>, vector<16x128xf32> -> vector<16x128xf32>
    %7 = arith.addf %3, %6 : vector<16x128xf32>
    %c0_6 = arith.constant 0 : index
    %c0_7 = arith.constant 0 : index
    %8 = vector.load %arg7[%c0_6, %c0_7] : memref<16x128xf32, #tpu.memory_space<vmem>>, vector<16x128xf32>
    tpu.vector_store %arg7[%c0_6, %c0_7], %7 {strides = array<i32>} : memref<16x128xf32, #tpu.memory_space<vmem>>, vector<16x128xf32>,
    %c0_i32_8 = arith.constant 0 : i32
    %9 = arith.cmpi eq, %arg2, %c0_i32_8 : i32
    %10 = arith.extui %9 : i1 to i32
    %c0_i32_9 = arith.constant 0 : i32
    %11 = arith.cmpi ne, %10, %c0_i32_9 : i32
    scf.if %11 {
      %c0_10 = arith.constant 0 : index
      %c0_11 = arith.constant 0 : index
      %12 = vector.load %arg7[%c0_10, %c0_11] : memref<16x128xf32, #tpu.memory_space<vmem>>, vector<16x128xf32>
      %13 = math.cos %12 : vector<16x128xf32>
      %cst_12 = arith.constant 1.0049876 : f32
      %14 = vector.broadcast %cst_12 : f32 to vector<16x128xf32>
      %15 = arith.mulf %14, %13 : vector<16x128xf32>
      %c0_13 = arith.constant 0 : index
      %c0_14 = arith.constant 0 : index
      %16 = vector.load %arg6[%c0_13, %c0_14] : memref<16x128xf32, #tpu.memory_space<vmem>>, vector<16x128xf32>
      tpu.vector_store %arg6[%c0_13, %c0_14], %15 {strides = array<i32>} : memref<16x128xf32, #tpu.memory_space<vmem>>, vector<16x128xf32>,
    } else {
    }
    return
  }
  func.func @transform_0(%arg0: i32, %arg1: i32, %arg2: i32) -> (i32, i32) {
    %c0_i32 = arith.constant 0 : i32
    return %arg0, %arg2 : i32, i32
  }
  func.func @transform_1(%arg0: i32, %arg1: i32, %arg2: i32) -> (i32, i32) {
    %c0_i32 = arith.constant 0 : i32
    return %arg2, %arg1 : i32, i32
  }
  func.func @transform_2(%arg0: i32, %arg1: i32, %arg2: i32) -> (i32, i32) {
    %c0_i32 = arith.constant 0 : i32
    %c0_i32_0 = arith.constant 0 : i32
    return %c0_i32, %arg1 : i32, i32
  }
  func.func @transform_3(%arg0: i32, %arg1: i32, %arg2: i32) -> (i32, i32) {
    %c0_i32 = arith.constant 0 : i32
    return %arg0, %arg1 : i32, i32
  }
}

</mosaic_0001>

<llo_original>
// kernel: tpu_custom_call.1
$region0: #{tpu_custom_call.1}
  #allocation0 [shape = 'u32[]', space=smem, size = 0x4, offset = 0x4, fixed_abs, tag = 'smem constant byte address 0x4 - core index']
  #allocation1 [shape = 'u32[144,128]{1,0:T(1,128)}', space=vmem, size = 0x12000, scoped, tag = 'internal scratch']
  #allocation2 [shape = 'f32[16,128]{1,0:T(8,128)}', space=vmem, size = 0x2000, scoped, tag = 'scratch operand']
  %s0 = inlined_call_operand.hbm [shape: bf16[16,128], index: 0, kind: input, shape index: {}]
  %s1 = inlined_call_operand.hbm [shape: bf16[128,128], index: 1, kind: input, shape index: {}]
  %s2 = inlined_call_operand.vmem [shape: f32[1,128], index: 2, kind: input, shape index: {}]
  %s3 = inlined_call_operand.hbm [shape: f32[16,128], index: 3, kind: output, shape index: {}]
  %s4 = sld [smem:[#allocation0]]
  $region38: #{tpu_custom_call.1} parent=0
    _
  %s6 = ssub.s32 1, %s4
  %s7 = scalar_select 0, %s6, %s4
  $region1: #{tpu_custom_call.1} parent=0
    #allocation3 [shape = 'u8[4096]{0}', space=vmem, size = 0x1000, scoped, tag = 'input window, operand 0, single buffered']
    #allocation4 [shape = 's32[1]{0}', space=sflag, size = 0x4, scoped, tag = 'scoped memory for tpu_custom_call.1']
    #allocation5 [shape = 's32[1]{0}', space=sflag, size = 0x4, scoped, tag = 'scoped memory for tpu_custom_call.1']
    #allocation6 [shape = 'u8[32768]{0}', space=vmem, size = 0x8000, scoped, tag = 'input window, operand 1, single buffered']
    #allocation7 [shape = 's32[1]{0}', space=sflag, size = 0x4, scoped, tag = 'scoped memory for tpu_custom_call.1']
    #allocation8 [shape = 'u8[8192]{0}', space=vmem, size = 0x2000, scoped, tag = 'output window, operand 0, single buffered']
    %8 = vsyncpa [#allocation4], 0
    %9 = vsyncpa [#allocation7], 0
    %10 = vsyncpa [#allocation5], 0
    // Predicated region
    $region2: #{tpu_custom_call.1} parent=1 // pred_check
      _
    $region3: #{tpu_custom_call.1} parent=1 // pred_check_branch
      %12 = sbr.rel (0) target = $region5
    $region4: #{tpu_custom_call.1} parent=1 // pred_region
      %s14 = ssub.s32 128, 128
      %15 = vsyncadd [#allocation4], %s14
      %s16 = sshll.u32 [#allocation3], 4
      %s17 = int_to_ptr.vmem [resolvable:$true] %s16
      %22 = dma.hbm_to_vmem [thread:$0]  %s0, 128, %s17, [#allocation4], 64, 64, 4
    $region5: #{tpu_custom_call.1} parent=1 // pred_fallthru
      _
    // Predicated region
    $region6: #{tpu_custom_call.1} parent=1 // pred_check
      _
    $region7: #{tpu_custom_call.1} parent=1 // pred_check_branch
      %24 = sbr.rel (0) target = $region9
    $region8: #{tpu_custom_call.1} parent=1 // pred_region
      %s26 = ssub.s32 1024, 1024
      %27 = vsyncadd [#allocation7], %s26
      %s28 = sshll.u32 [#allocation6], 4
      %s29 = int_to_ptr.vmem [resolvable:$true] %s28
      %34 = dma.hbm_to_vmem [thread:$0]  %s1, 1024, %s29, [#allocation7], 64, 64, 4
    $region9: #{tpu_custom_call.1} parent=1 // pred_fallthru
      _
    // Predicated region
    $region10: #{tpu_custom_call.1} parent=1 // pred_check
      _
    $region11: #{tpu_custom_call.1} parent=1 // pred_check_branch
      %36 = sbr.rel (0) target = $region13
    $region12: #{tpu_custom_call.1} parent=1 // pred_region
      _
    $region13: #{tpu_custom_call.1} parent=1 // pred_fallthru
      _
    // Predicated region
    $region14: #{tpu_custom_call.1} parent=1 // pred_check
      _
    $region15: #{tpu_custom_call.1} parent=1 // pred_check_branch
      %38 = sbr.rel (0) target = $region17
    $region16: #{tpu_custom_call.1} parent=1 // pred_region
      %39 = dma.done [#allocation4], 128
    $region17: #{tpu_custom_call.1} parent=1 // pred_fallthru
      _
    // Predicated region
    $region18: #{tpu_custom_call.1} parent=1 // pred_check
      _
    $region19: #{tpu_custom_call.1} parent=1 // pred_check_branch
      %41 = sbr.rel (0) target = $region21
    $region20: #{tpu_custom_call.1} parent=1 // pred_region
      %42 = dma.done [#allocation7], 1024
    $region21: #{tpu_custom_call.1} parent=1 // pred_fallthru
      _
    %p44 = scmp.eq.s32.totalorder 0, 0
    // Predicated region
    $region22: #{tpu_custom_call.1} parent=1 // pred_check
      %p45 = pneg %p44
    $region23: #{tpu_custom_call.1} parent=1 // pred_check_branch
      %47 = sbr.rel (%p45) target = $region25
    $region24: #{tpu_custom_call.1} parent=1 // pred_region
      %v48 = vld [vmem:[%s2] sm:$0x1]
      %v50 = vlaneseq
      %v51 = vshrl.u32 %v50, 7
      %v52 = vsub.s32 0, %v51
      %v53 = vrot.slane %v48, %v52
      %55 = vst [vmem:[#allocation2] sm:$0xff] %v53
      %56 = vst [vmem:[#allocation2 + $0x8] sm:$0xff] %v53
    $region25: #{tpu_custom_call.1} parent=1 // pred_fallthru
      _
    %v57 = vld [vmem:[#allocation2] sm:$0xff]
    %v58 = vld [vmem:[#allocation2 + $0x8] sm:$0xff]
    %v59 = vld [vmem:[#allocation3] sm:$0xf]
    %v60 = vld [vmem:[#allocation3 + $0x4] sm:$0xf]
    %v61 = vld [vmem:[#allocation6] sm:$0xf]
    %v62 = vld [vmem:[#allocation6 + $0x4] sm:$0xf]
    %v63 = vld [vmem:[#allocation6 + $0x8] sm:$0xf]
    %v64 = vld [vmem:[#allocation6 + $0xc] sm:$0xf]
    %v65 = vld [vmem:[#allocation6 + $0x10] sm:$0xf]
    %v66 = vld [vmem:[#allocation6 + $0x14] sm:$0xf]
    %v67 = vld [vmem:[#allocation6 + $0x18] sm:$0xf]
    %v68 = vld [vmem:[#allocation6 + $0x1c] sm:$0xf]
    %v69 = vld [vmem:[#allocation6 + $0x20] sm:$0xf]
    %v70 = vld [vmem:[#allocation6 + $0x24] sm:$0xf]
    %v71 = vld [vmem:[#allocation6 + $0x28] sm:$0xf]
    %v72 = vld [vmem:[#allocation6 + $0x2c] sm:$0xf]
    %v73 = vld [vmem:[#allocation6 + $0x30] sm:$0xf]
    %v74 = vld [vmem:[#allocation6 + $0x34] sm:$0xf]
    %v75 = vld [vmem:[#allocation6 + $0x38] sm:$0xf]
    %v76 = vld [vmem:[#allocation6 + $0x3c] sm:$0xf]
    %v79 = vunpack.c.l.b16 %v59
    %v80 = vunpack.c.l.b16 %v60
    %v81 = vpack.c.b16 %v80, %v79
    %v99 = vunpack.c.l.b16 %v61
    %v100 = vunpack.c.l.b16 %v62
    %v101 = vunpack.c.l.b16 %v63
    %v102 = vunpack.c.l.b16 %v64
    %v103 = vunpack.c.l.b16 %v65
    %v104 = vunpack.c.l.b16 %v66
    %v105 = vunpack.c.l.b16 %v67
    %v106 = vunpack.c.l.b16 %v68
    %v107 = vunpack.c.l.b16 %v69
    %v108 = vunpack.c.l.b16 %v70
    %v109 = vunpack.c.l.b16 %v71
    %v110 = vunpack.c.l.b16 %v72
    %v111 = vunpack.c.l.b16 %v73
    %v112 = vunpack.c.l.b16 %v74
    %v113 = vunpack.c.l.b16 %v75
    %v114 = vunpack.c.l.b16 %v76
    %v115 = vpack.c.b16 %v100, %v99
    %v116 = vpack.c.b16 %v102, %v101
    %v117 = vpack.c.b16 %v104, %v103
    %v118 = vpack.c.b16 %v106, %v105
    %v119 = vpack.c.b16 %v108, %v107
    %v120 = vpack.c.b16 %v110, %v109
    %v121 = vpack.c.b16 %v112, %v111
    %v122 = vpack.c.b16 %v114, %v113
    %131 = vmatprep.subr.bf16.mxu0 0
    %132 = vmatpush1.bf16.msra.mxu0 %v115
    %133 = vmatprep.subr.bf16.mxu0 0
    %134 = vmatpush1.bf16.msra.mxu0 %v116
    %135 = vmatprep.subr.bf16.mxu0 0
    %136 = vmatpush1.bf16.msra.mxu0 %v117
    %137 = vmatprep.subr.bf16.mxu0 0
    %138 = vmatpush1.bf16.msra.mxu0 %v118
    %139 = vmatprep.subr.bf16.mxu0 0
    %140 = vmatpush1.bf16.msra.mxu0 %v119
    %141 = vmatprep.subr.bf16.mxu0 0
    %142 = vmatpush1.bf16.msra.mxu0 %v120
    %143 = vmatprep.subr.bf16.mxu0 0
    %144 = vmatpush1.bf16.msra.mxu0 %v121
    %145 = vmatprep.subr.bf16.mxu0 0
    %146 = vmatpush1.bf16.msra.mxu0 %v122
    %147 = vmatprep.subr.bf16.mxu0 0
    %148 = vmatpush1.bf16.msra.mxu0 0
    %149 = vmatprep.subr.bf16.mxu0 0
    %150 = vmatpush1.bf16.msra.mxu0 0
    %151 = vmatprep.subr.bf16.mxu0 0
    %152 = vmatpush1.bf16.msra.mxu0 0
    %153 = vmatprep.subr.bf16.mxu0 0
    %154 = vmatpush1.bf16.msra.mxu0 0
    %155 = vmatprep.subr.bf16.mxu0 0
    %156 = vmatpush1.bf16.msra.mxu0 0
    %157 = vmatprep.subr.bf16.mxu0 0
    %158 = vmatpush1.bf16.msra.mxu0 0
    %159 = vmatprep.subr.bf16.mxu0 0
    %160 = vmatpush1.bf16.msra.mxu0 0
    %161 = vmatprep.subr.bf16.mxu0 0
    %162 = vmatpush1.bf16.msra.mxu0 0
    %163 = vmatprep.mubr.bf16.mxu0 0
    %164 = vmatmul.mubr.bf16.gmra.mrb[0].mxu0 %v81
    %v165 = vpop.f32.mrb[0].mxu0
    %v166 = vadd.f32 0.0, %v165
    %v167 = vpop.f32.mrb[0].mxu0
    %v168 = vpop.f32.mrb[0].mxu0
    %v169 = vadd.f32 0.0, %v168
    %v170 = vpop.f32.mrb[0].mxu0
    %171 = vdwg.mxu0
    %v172 = vadd.f32 %v57, %v166
    %v173 = vadd.f32 %v58, %v169
    %174 = vst [vmem:[#allocation2] sm:$0xff] %v172
    %175 = vst [vmem:[#allocation2 + $0x8] sm:$0xff] %v173
    // Predicated region
    $region26: #{tpu_custom_call.1} parent=1 // pred_check
      %p176 = pneg %p44
    $region27: #{tpu_custom_call.1} parent=1 // pred_check_branch
      %178 = sbr.rel (%p176) target = $region29
    $region28: #{tpu_custom_call.1} parent=1 // pred_region
      %v179 = vld [vmem:[#allocation2] sm:$0xff]
      %v180 = vld [vmem:[#allocation2 + $0x8] sm:$0xff]
      %v181 = vand.u32 2147483647, %v179
      %vm182 = vcmp.le.f32.partialorder %v181, 0.7853982
      %vm183 = vcmp.lt.s32.totalorder %v179, 0
      %v184 = vand.u32 %v179, 2139095040
      %v185 = vshrl.u32 %v184, 23
      %v186 = vsub.s32 %v185, 127
      %v187 = vand.u32 2147483647, %v179
      %v188 = vand.u32 %v187, 8388607
      %v189 = vor.u32 %v188, 8388608
      %v190 = vsub.s32 0, %v189
      %v191 = vadd.s32 %v186, 1
      %vm192 = vcmp.gt.s32.totalorder %v191, 0
      %v193 = vsel %vm192, %v191, 0
      %v194 = vshrl.u32 %v193, 5
      %v195 = vand.u32 %v193, 31
      %v196 = vsub.s32 32, %v195
      %v197 = vshrl.u32 683565275, %v196
      %v198 = vshll.u32 683565275, %v195
      %v199 = vshrl.u32 2475754826, %v196
      %v200 = vor.u32 %v198, %v199
      %v201 = vshll.u32 2475754826, %v195
      %v202 = vshrl.u32 2131351028, %v196
      %v203 = vor.u32 %v201, %v202
      %v204 = vshll.u32 2131351028, %v195
      %v205 = vshrl.u32 2102212464, %v196
      %v206 = vor.u32 %v204, %v205
      %v207 = vshll.u32 2102212464, %v195
      %v208 = vshrl.u32 920167782, %v196
      %v209 = vor.u32 %v207, %v208
      %v210 = vshll.u32 920167782, %v195
      %v211 = vshrl.u32 1326507024, %v196
      %v212 = vor.u32 %v210, %v211
      %vm213 = vcmp.lt.s32.totalorder %v194, 1
      %vm214 = vcmp.lt.s32.totalorder %v194, 2
      %vm215 = vcmp.lt.s32.totalorder %v194, 3
      %vm216 = vcmp.lt.s32.totalorder %v194, 4
      %v217 = vsel %vm213, %v197, %v200
      %v218 = vsel %vm216, %v206, 2102212464
      %v219 = vsel %vm215, %v203, %v218
      %v220 = vsel %vm214, %v217, %v219
      %v221 = vsel %vm213, %v200, %v203
      %v222 = vsel %vm216, %v209, 920167782
      %v223 = vsel %vm215, %v206, %v222
      %v224 = vsel %vm214, %v221, %v223
      %v225 = vsel %vm213, %v203, %v206
      %v226 = vsel %vm216, %v212, 1326507024
      %v227 = vsel %vm215, %v209, %v226
      %v228 = vsel %vm214, %v225, %v227
      %v229 = vshll.u32 %v189, 8
      %v230 = vmul.u32.u64.compose %v229, %v228
      %v231 = vextract.low.u32 %v230
      %v232 = vextract.high.u32 %v230
      %v233 = vmul.u32.u64.compose %v229, %v224
      %v234 = vextract.low.u32 %v233
      %v235 = vextract.high.u32 %v233
      %v236 = vmul.u32 %v229, %v220
      %v237 = vadd.s32 %v232, %v234
      %vm238 = vc.u32 %v232, %v234
      %v239 = vadd.s32 %v235, 1
      %v240 = vsel %vm238, %v239, %v235
      %v241 = vadd.s32 %v236, %v240
      %v242 = vadd.s32 %v241, 536870912
      %v243 = vshrl.u32 %v242, 30
      %v244 = vshll.u32 %v243, 30
      %v245 = vsub.s32 %v241, %v244
      %vm246 = vcmp.lt.s32.totalorder %v245, 0
      %v247 = vsub.s32 0, %v245
      %v248 = vsel %vm246, %v247, %v245
      %v249 = vclz %v248
      %v250 = vsub.s32 %v249, 2
      %vm251 = vcmp.gt.s32.totalorder 0, %v250
      %v252 = vsel %vm251, 0, %v250
      %v253 = vsub.s32 32, %v252
      %v254 = vshll.u32 %v245, %v252
      %v255 = vshrl.u32 %v237, %v253
      %v256 = vor.u32 %v254, %v255
      %v257 = vsub.s32 4294967266, %v252
      %v258 = vadd.s32 %v257, 127
      %v259 = vshll.u32 %v258, 23
      %v260 = vor.u32 4788187, %v259
      %v261 = vand.u32 2147483647, %v260
      %v263 = vcvt.s32.f32 %v256
      %v264 = vmul.f32 %v263, %v261
      %v265 = vxor.u32 %v264, 2147483648
      %v266 = vsel %vm183, %v265, %v264
      %v267 = vsub.s32 4, %v243
      %v268 = vsel %vm183, %v267, %v243
      %v269 = vsel %vm182, %v179, %v266
      %v270 = vsel %vm182, 0, %v268
      %v271 = vcosq.f32.pop %v269
      %v272 = vsinq.f32.pop %v269
      %vm273 = vweird.f32 %v179
      %v274 = vand.u32 %v270, 3
      %vm275 = vcmp.lt.s32.totalorder %v274, 2
      %vm276 = vcmp.eq.s32.totalorder %v274, 0
      %v277 = vxor.u32 %v272, 2147483648
      %v278 = vsel %vm276, %v271, %v277
      %vm279 = vcmp.eq.s32.totalorder %v274, 2
      %v280 = vxor.u32 %v271, 2147483648
      %v281 = vsel %vm279, %v280, %v272
      %v282 = vsel %vm275, %v278, %v281
      %v283 = vsel %vm273, nan, %v282
      %v284 = vand.u32 2147483647, %v180
      %vm285 = vcmp.le.f32.partialorder %v284, 0.7853982
      %vm286 = vcmp.lt.s32.totalorder %v180, 0
      %v287 = vand.u32 %v180, 2139095040
      %v288 = vshrl.u32 %v287, 23
      %v289 = vsub.s32 %v288, 127
      %v290 = vand.u32 2147483647, %v180
      %v291 = vand.u32 %v290, 8388607
      %v292 = vor.u32 %v291, 8388608
      %v293 = vsub.s32 0, %v292
      %v294 = vadd.s32 %v289, 1
      %vm295 = vcmp.gt.s32.totalorder %v294, 0
      %v296 = vsel %vm295, %v294, 0
      %v297 = vshrl.u32 %v296, 5
      %v298 = vand.u32 %v296, 31
      %v299 = vsub.s32 32, %v298
      %v300 = vshrl.u32 683565275, %v299
      %v301 = vshll.u32 683565275, %v298
      %v302 = vshrl.u32 2475754826, %v299
      %v303 = vor.u32 %v301, %v302
      %v304 = vshll.u32 2475754826, %v298
      %v305 = vshrl.u32 2131351028, %v299
      %v306 = vor.u32 %v304, %v305
      %v307 = vshll.u32 2131351028, %v298
      %v308 = vshrl.u32 2102212464, %v299
      %v309 = vor.u32 %v307, %v308
      %v310 = vshll.u32 2102212464, %v298
      %v311 = vshrl.u32 920167782, %v299
      %v312 = vor.u32 %v310, %v311
      %v313 = vshll.u32 920167782, %v298
      %v314 = vshrl.u32 1326507024, %v299
      %v315 = vor.u32 %v313, %v314
      %vm316 = vcmp.lt.s32.totalorder %v297, 1
      %vm317 = vcmp.lt.s32.totalorder %v297, 2
      %vm318 = vcmp.lt.s32.totalorder %v297, 3
      %vm319 = vcmp.lt.s32.totalorder %v297, 4
      %v320 = vsel %vm316, %v300, %v303
      %v321 = vsel %vm319, %v309, 2102212464
      %v322 = vsel %vm318, %v306, %v321
      %v323 = vsel %vm317, %v320, %v322
      %v324 = vsel %vm316, %v303, %v306
      %v325 = vsel %vm319, %v312, 920167782
      %v326 = vsel %vm318, %v309, %v325
      %v327 = vsel %vm317, %v324, %v326
      %v328 = vsel %vm316, %v306, %v309
      %v329 = vsel %vm319, %v315, 1326507024
      %v330 = vsel %vm318, %v312, %v329
      %v331 = vsel %vm317, %v328, %v330
      %v332 = vshll.u32 %v292, 8
      %v333 = vmul.u32.u64.compose %v332, %v331
      %v334 = vextract.low.u32 %v333
      %v335 = vextract.high.u32 %v333
      %v336 = vmul.u32.u64.compose %v332, %v327
      %v337 = vextract.low.u32 %v336
      %v338 = vextract.high.u32 %v336
      %v339 = vmul.u32 %v332, %v323
      %v340 = vadd.s32 %v335, %v337
      %vm341 = vc.u32 %v335, %v337
      %v342 = vadd.s32 %v338, 1
      %v343 = vsel %vm341, %v342, %v338
      %v344 = vadd.s32 %v339, %v343
      %v345 = vadd.s32 %v344, 536870912
      %v346 = vshrl.u32 %v345, 30
      %v347 = vshll.u32 %v346, 30
      %v348 = vsub.s32 %v344, %v347
      %vm349 = vcmp.lt.s32.totalorder %v348, 0
      %v350 = vsub.s32 0, %v348
      %v351 = vsel %vm349, %v350, %v348
      %v352 = vclz %v351
      %v353 = vsub.s32 %v352, 2
      %vm354 = vcmp.gt.s32.totalorder 0, %v353
      %v355 = vsel %vm354, 0, %v353
      %v356 = vsub.s32 32, %v355
      %v357 = vshll.u32 %v348, %v355
      %v358 = vshrl.u32 %v340, %v356
      %v359 = vor.u32 %v357, %v358
      %v360 = vsub.s32 4294967266, %v355
      %v361 = vadd.s32 %v360, 127
      %v362 = vshll.u32 %v361, 23
      %v363 = vor.u32 4788187, %v362
      %v364 = vand.u32 2147483647, %v363
      %v366 = vcvt.s32.f32 %v359
      %v367 = vmul.f32 %v366, %v364
      %v368 = vxor.u32 %v367, 2147483648
      %v369 = vsel %vm286, %v368, %v367
      %v370 = vsub.s32 4, %v346
      %v371 = vsel %vm286, %v370, %v346
      %v372 = vsel %vm285, %v180, %v369
      %v373 = vsel %vm285, 0, %v371
      %v374 = vcosq.f32.pop %v372
      %v375 = vsinq.f32.pop %v372
      %vm376 = vweird.f32 %v180
      %v377 = vand.u32 %v373, 3
      %vm378 = vcmp.lt.s32.totalorder %v377, 2
      %vm379 = vcmp.eq.s32.totalorder %v377, 0
      %v380 = vxor.u32 %v375, 2147483648
      %v381 = vsel %vm379, %v374, %v380
      %vm382 = vcmp.eq.s32.totalorder %v377, 2
      %v383 = vxor.u32 %v374, 2147483648
      %v384 = vsel %vm382, %v383, %v375
      %v385 = vsel %vm378, %v381, %v384
      %v386 = vsel %vm376, nan, %v385
      %v387 = vmul.f32 %v283, 1.0049876
      %v388 = vmul.f32 %v386, 1.0049876
      %389 = vst [vmem:[#allocation8] sm:$0xff] %v387
      %390 = vst [vmem:[#allocation8 + $0x8] sm:$0xff] %v388
    $region29: #{tpu_custom_call.1} parent=1 // pred_fallthru
      _
    // Predicated region
    $region30: #{tpu_custom_call.1} parent=1 // pred_check
      _
    $region31: #{tpu_custom_call.1} parent=1 // pred_check_branch
      %392 = sbr.rel (0) target = $region33
    $region32: #{tpu_custom_call.1} parent=1 // pred_region
      %s394 = ssub.s32 256, 256
      %395 = vsyncadd [#allocation5], %s394
      %s396 = sshll.u32 [#allocation8], 4
      %s397 = int_to_ptr.vmem [resolvable:$true] %s396
      %402 = dma.vmem_to_hbm [thread:$0]  %s397, 256, %s3, [#allocation5], 128, 128, 8
    $region33: #{tpu_custom_call.1} parent=1 // pred_fallthru
      _
    // Predicated region
    $region34: #{tpu_custom_call.1} parent=1 // pred_check
      _
    $region35: #{tpu_custom_call.1} parent=1 // pred_check_branch
      %404 = sbr.rel (0) target = $region37
    $region36: #{tpu_custom_call.1} parent=1 // pred_region
      %405 = dma.done [#allocation5], 256
    $region37: #{tpu_custom_call.1} parent=1 // pred_fallthru
      _
    %406 = vsyncpa [#allocation4], 1
    %407 = vsyncpa [#allocation7], 1
    %408 = vsyncpa [#allocation5], 1

</llo_original>
